<compile_context>
chip_gen: v7x
topology: tpu7x:2x2x1
jax: 0.10.0
libtpu: 0.0.40
codegen_flags: <defaults>
</compile_context>

<pallas_src>
import functools
import math

import jax
import jax.numpy as jnp
from jax import lax
from jax.experimental import pallas as pl
from jax.experimental.pallas import tpu as pltpu

_LANE = 128


def _round_up(x, m):
    return ((x + m - 1) // m) * m


def _stable_softplus(x):
    # softplus(x) = log1p(exp(x)), written as max(x,0)+log1p(exp(-|x|)) so it
    # never overflows/underflows.  Mathematically identical to the module's
    # torch.log1p(torch.exp(x)).
    return jnp.maximum(x, 0.0) + jnp.log1p(jnp.exp(-jnp.abs(x)))


def _kl_gaussian(mu, rho, sigma, prior_std):
    # 0.5 * sum((sigma^2 + mu^2)/prior_var - 1 + 2*log(prior_std/sigma)),
    # with the scalars constant-folded: one mul + one add per element.
    inv_prior_var = 1.0 / (prior_std * prior_std)
    c = 2.0 * math.log(prior_std) - 1.0
    # log(softplus(rho)) -> rho for very negative rho (softplus underflows).
    log_sigma = jnp.where(rho < -25.0, rho, jnp.log(sigma))
    return 0.5 * jnp.sum((sigma * sigma + mu * mu) * inv_prior_var + c
                         - 2.0 * log_sigma)


def prepare_params(params, prior_std=1.0):
    """One-time (per optimizer update) parameter prep, off the forward hot path.

    params: list of (weight_mu, weight_rho, bias_mu, bias_rho) in PyTorch
    layout (out, in) / (out,).  Returns (padded_layers, total_kl) where each
    padded layer is (wmu_T, wsigma_T, bmu, bsigma) padded to lane-dense
    (in_p, out_p) / (1, out_p) and PRE-TRANSPOSED for a canonical MXU feed.
    Pad values are 0 for mu AND sigma, so padded sampled weights are exactly 0.
    """
    prior_std = float(prior_std)
    dims = [params[0][0].shape[1]] + [wmu.shape[0] for (wmu, _, _, _) in params]
    dims_p = [_round_up(d, _LANE) for d in dims]

    padded = []
    total_kl = jnp.float32(0.0)
    for i, (wmu, wrho, bmu, brho) in enumerate(params):
        out_d, in_d = wmu.shape
        in_p, out_p = dims_p[i], dims_p[i + 1]
        wmu = wmu.astype(jnp.float32)
        wrho = wrho.astype(jnp.float32)
        bmu = bmu.astype(jnp.float32)
        brho = brho.astype(jnp.float32)

        wsig = _stable_softplus(wrho)
        bsig = _stable_softplus(brho)

        # KL on UNPADDED params (pure function of params -> not kernel work).
        total_kl = (total_kl
                    + _kl_gaussian(wmu, wrho, wsig, prior_std)
                    + _kl_gaussian(bmu, brho, bsig, prior_std))

        wmu_t = jnp.zeros((in_p, out_p), jnp.float32).at[:in_d, :out_d].set(wmu.T)
        wsig_t = jnp.zeros((in_p, out_p), jnp.float32).at[:in_d, :out_d].set(wsig.T)
        bmu_p = jnp.zeros((1, out_p), jnp.float32).at[:, :out_d].set(
            bmu.reshape(1, -1))
        bsig_p = jnp.zeros((1, out_p), jnp.float32).at[:, :out_d].set(
            bsig.reshape(1, -1))
        padded.append((wmu_t, wsig_t, bmu_p, bsig_p))
    return padded, total_kl


def sample_eps_padded(key, layer_sizes, n_samples, dtype=jnp.bfloat16):
    """eps ~ N(0,1) generated directly in padded/transposed layout, in bf16.
    No masking of the pad region is needed because padded mu/sigma are 0."""
    dims_p = [_round_up(d, _LANE) for d in layer_sizes]
    eps = []
    for i in range(len(layer_sizes) - 1):
        in_p, out_p = dims_p[i], dims_p[i + 1]
        key, k1, k2 = jax.random.split(key, 3)
        eps_w = jax.random.normal(k1, (n_samples, in_p, out_p), dtype)
        eps_b = jax.random.normal(k2, (n_samples, 1, out_p), dtype)
        eps.append((eps_w, eps_b))
    return eps


def _bayesian_nn_kernel(*refs, n_layers, matmul_dtype):
    x_ref = refs[0]
    p = refs[1:1 + 6 * n_layers]
    out_ref = refs[1 + 6 * n_layers]

    h = x_ref[...]                                            # (B_p, in0_p) f32
    for i in range(n_layers):
        wmu_t, wsig_t, bmu, bsig, eps_w, eps_b = (
            r[...] for r in p[6 * i:6 * i + 6])
        # Reparameterized sample (f32 VPU work); padded rows/cols are exactly 0.
        w = wmu_t + wsig_t * eps_w.astype(jnp.float32)        # (in_p, out_p)
        b = bmu + bsig * eps_b.astype(jnp.float32)            # (1, out_p)
        # Canonical (M,K)x(K,N) MXU matmul (weights pre-transposed, no XLU
        # transpose); bf16 operands, f32 accumulation.
        h = lax.dot_general(h.astype(matmul_dtype), w.astype(matmul_dtype),
                            (((1,), (0,)), ((), ())),
                            preferred_element_type=jnp.float32) + b
        if i < n_layers - 1:
            h = jnp.maximum(h, 0.0)                           # ReLU between layers
    out_ref[...] = h.astype(out_ref.dtype)


@functools.partial(jax.jit, static_argnames=("layer_sizes", "matmul_dtype"))
def bayesian_nn_forward(x, prepared, eps_padded, *, layer_sizes,
                        matmul_dtype=jnp.bfloat16):
    """Fused BayesianNN forward for all n_samples MC samples in one pallas_call.
    Returns (out[(n_samples, batch, out_dim)], total_kl)."""
    padded_layers, total_kl = prepared
    n_layers = len(padded_layers)
    layer_sizes = tuple(layer_sizes)
    dims_p = [_round_up(d, _LANE) for d in layer_sizes]
    n_samples = eps_padded[0][0].shape[0]
    batch, in0 = x.shape
    sub = 16 if matmul_dtype == jnp.bfloat16 else 8
    batch_p = _round_up(max(batch, sub), sub)

    # The only per-call padding left: the (tiny) activation input.
    x_p = jnp.zeros((batch_p, dims_p[0]), jnp.float32).at[:batch, :in0].set(
        x.astype(jnp.float32))

    flat_inputs = [x_p]
    in_specs = [pl.BlockSpec((batch_p, dims_p[0]), lambda s: (0, 0))]
    flops = 0
    bytes_accessed = x_p.size * 4
    block_bytes = x_p.size * 4
    for i in range(n_layers):
        in_p, out_p = dims_p[i], dims_p[i + 1]
        wmu_t, wsig_t, bmu_p, bsig_p = padded_layers[i]
        eps_w, eps_b = eps_padded[i]
        eps_isz = eps_w.dtype.itemsize
        flat_inputs += [wmu_t, wsig_t, bmu_p, bsig_p, eps_w, eps_b]
        in_specs += [
            pl.BlockSpec((in_p, out_p), lambda s: (0, 0)),          # wmu_T
            pl.BlockSpec((in_p, out_p), lambda s: (0, 0)),          # wsigma_T
            pl.BlockSpec((1, out_p), lambda s: (0, 0)),             # bmu
            pl.BlockSpec((1, out_p), lambda s: (0, 0)),             # bsigma
            pl.BlockSpec((None, in_p, out_p), lambda s: (s, 0, 0)),  # eps_w[s]
            pl.BlockSpec((None, 1, out_p), lambda s: (s, 0, 0)),     # eps_b[s]
        ]
        flops += 2 * n_samples * batch_p * in_p * out_p
        bytes_accessed += (2 * in_p * out_p + 2 * out_p) * 4
        bytes_accessed += n_samples * (in_p * out_p + out_p) * eps_isz
        block_bytes += (2 * in_p * out_p + 2 * out_p) * 4
        block_bytes += (in_p * out_p + out_p) * eps_isz
    bytes_accessed += n_samples * batch_p * dims_p[-1] * 4
    block_bytes += batch_p * dims_p[-1] * 4

    out_spec = pl.BlockSpec((None, batch_p, dims_p[-1]), lambda s: (s, 0, 0))

    # Explicit VMEM budget: double-buffered blocks + headroom, capped at v7x's
    # 64 MiB physical VMEM (v5e default scoped limit is only 16 MiB).
    vmem_limit = int(min(2 * block_bytes + (8 << 20), 64 << 20))

    kernel = functools.partial(_bayesian_nn_kernel,
                               n_layers=n_layers, matmul_dtype=matmul_dtype)
    out_pad = pl.pallas_call(
        kernel,
        out_shape=jax.ShapeDtypeStruct((n_samples, batch_p, dims_p[-1]),
                                       jnp.float32),
        grid=(n_samples,),
        in_specs=in_specs,
        out_specs=out_spec,
        compiler_params=pltpu.CompilerParams(
            dimension_semantics=("parallel",),
            vmem_limit_bytes=vmem_limit),
        cost_estimate=pl.CostEstimate(flops=flops, transcendentals=0,
                                      bytes_accessed=bytes_accessed),
    )(*flat_inputs)
    return out_pad[:, :batch, :layer_sizes[-1]], total_kl


def init_params(key, layer_sizes):
    """Synthetic small-random parameters (the module __init__ uses zeros;
    random values exercise the kernel math non-trivially)."""
    params = []
    for in_dim, out_dim in zip(layer_sizes[:-1], layer_sizes[1:]):
        key, k1, k2, k3, k4 = jax.random.split(key, 5)
        wmu = 0.1 * jax.random.normal(k1, (out_dim, in_dim), jnp.float32)
        wrho = -1.0 + 0.1 * jax.random.normal(k2, (out_dim, in_dim), jnp.float32)
        bmu = 0.1 * jax.random.normal(k3, (out_dim,), jnp.float32)
        brho = -1.0 + 0.1 * jax.random.normal(k4, (out_dim,), jnp.float32)
        params.append((wmu, wrho, bmu, brho))
    return params


if __name__ == "__main__":
    layer_sizes = (32, 64, 16)     # BayesianNN([32, 64, 16])
    batch = 8
    n_samples = 2                  # MC samples amortize one parameter DMA
    prior_std = 1.0

    root = jax.random.PRNGKey(0)
    kx, kp, ke = jax.random.split(root, 3)

    x = jax.random.normal(kx, (batch, layer_sizes[0]), jnp.float32)
    params = init_params(kp, layer_sizes)

    prepared = prepare_params(params, prior_std=prior_std)       # one-time
    eps_padded = sample_eps_padded(ke, layer_sizes, n_samples)   # per forward

    # Default perf path (bf16 matmul operands, f32 accumulation).
    out_bf16, total_kl = bayesian_nn_forward(x, prepared, eps_padded,
                                             layer_sizes=layer_sizes)
    # Exact-semantics path (f32 matmul) for a tight correctness check.
    out_f32, _ = bayesian_nn_forward(x, prepared, eps_padded,
                                     layer_sizes=layer_sizes,
                                     matmul_dtype=jnp.float32)
    out_bf16, out_f32, total_kl = jax.block_until_ready(
        (out_bf16, out_f32, total_kl))

    # Pure-JAX reference (same math as the PyTorch module, same eps).
    def ref_forward(x, params, eps_list, matmul_dtype):
        total_kl = jnp.float32(0.0)
        h = x
        n = len(params)
        for i, ((wmu, wrho, bmu, brho), (ew, eb)) in enumerate(
                zip(params, eps_list)):
            ws = _stable_softplus(wrho)     # == log1p(exp(rho))
            bs = _stable_softplus(brho)
            w = wmu + ws * ew
            b = bmu + bs * eb
            h = jnp.dot(h.astype(matmul_dtype), w.T.astype(matmul_dtype),
                        preferred_element_type=jnp.float32) + b
            if i < n - 1:
                h = jnp.maximum(h, 0.0)
            klw = 0.5 * jnp.sum((ws ** 2 + wmu ** 2) / prior_std ** 2 - 1.0
                                + 2.0 * jnp.log(prior_std / ws))
            klb = 0.5 * jnp.sum((bs ** 2 + bmu ** 2) / prior_std ** 2 - 1.0
                                + 2.0 * jnp.log(prior_std / bs))
            total_kl = total_kl + klw + klb
        return h, total_kl

    assert out_bf16.shape == (n_samples, batch, layer_sizes[-1])
    assert out_f32.shape == (n_samples, batch, layer_sizes[-1])
    for s in range(n_samples):
        eps_list = []
        for i in range(len(params)):
            in_d, out_d = layer_sizes[i], layer_sizes[i + 1]
            ew = eps_padded[i][0][s, :in_d, :out_d].astype(jnp.float32).T
            eb = eps_padded[i][1][s, 0, :out_d].astype(jnp.float32)
            eps_list.append((ew, eb))
        ref_out_f32, ref_kl = ref_forward(x, params, eps_list, jnp.float32)
        ref_out_bf16, _ = ref_forward(x, params, eps_list, jnp.bfloat16)
        assert jnp.allclose(out_f32[s], ref_out_f32, atol=1e-4, rtol=1e-4)
        assert jnp.allclose(out_bf16[s], ref_out_bf16, atol=5e-3, rtol=5e-3)
        assert jnp.allclose(total_kl, ref_kl, atol=1e-2, rtol=1e-4)

    print("KERNEL_OK")
</pallas_src>

<mosaic_0001>
module attributes {stable_mosaic.version = 11 : i64} {
  func.func @_bayesian_nn_kernel(%arg0: i32, %arg1: memref<16x128xf32, #tpu.memory_space<vmem>>, %arg2: memref<128x128xf32, #tpu.memory_space<vmem>>, %arg3: memref<128x128xf32, #tpu.memory_space<vmem>>, %arg4: memref<1x128xf32, #tpu.memory_space<vmem>>, %arg5: memref<1x128xf32, #tpu.memory_space<vmem>>, %arg6: memref<1x128x128xbf16, #tpu.memory_space<vmem>>, %arg7: memref<1x1x128xbf16, #tpu.memory_space<vmem>>, %arg8: memref<128x128xf32, #tpu.memory_space<vmem>>, %arg9: memref<128x128xf32, #tpu.memory_space<vmem>>, %arg10: memref<1x128xf32, #tpu.memory_space<vmem>>, %arg11: memref<1x128xf32, #tpu.memory_space<vmem>>, %arg12: memref<1x128x128xbf16, #tpu.memory_space<vmem>>, %arg13: memref<1x1x128xbf16, #tpu.memory_space<vmem>>, %arg14: memref<1x16x128xf32, #tpu.memory_space<vmem>>) attributes {dimension_semantics = [#tpu.dimension_semantics<parallel>], iteration_bounds = array<i64: 2>, scalar_prefetch = 0 : i64, scratch_operands = 0 : i64, tpu.core_type = #tpu.core_type<tc>, window_params = [{pipeline_mode = #tpu.pipeline_mode<synchronous>, transform_indices = @transform_0, window_bounds = array<i64: 16, 128>}, {pipeline_mode = #tpu.pipeline_mode<synchronous>, transform_indices = @transform_1, window_bounds = array<i64: 128, 128>}, {pipeline_mode = #tpu.pipeline_mode<synchronous>, transform_indices = @transform_2, window_bounds = array<i64: 128, 128>}, {pipeline_mode = #tpu.pipeline_mode<synchronous>, transform_indices = @transform_3, window_bounds = array<i64: 1, 128>}, {pipeline_mode = #tpu.pipeline_mode<synchronous>, transform_indices = @transform_4, window_bounds = array<i64: 1, 128>}, {transform_indices = @transform_5, window_bounds = array<i64: 1, 128, 128>}, {transform_indices = @transform_6, window_bounds = array<i64: 1, 1, 128>}, {pipeline_mode = #tpu.pipeline_mode<synchronous>, transform_indices = @transform_7, window_bounds = array<i64: 128, 128>}, {pipeline_mode = #tpu.pipeline_mode<synchronous>, transform_indices = @transform_8, window_bounds = array<i64: 128, 128>}, {pipeline_mode = #tpu.pipeline_mode<synchronous>, transform_indices = @transform_9, window_bounds = array<i64: 1, 128>}, {pipeline_mode = #tpu.pipeline_mode<synchronous>, transform_indices = @transform_10, window_bounds = array<i64: 1, 128>}, {transform_indices = @transform_11, window_bounds = array<i64: 1, 128, 128>}, {transform_indices = @transform_12, window_bounds = array<i64: 1, 1, 128>}, {transform_indices = @transform_13, window_bounds = array<i64: 1, 16, 128>}]} {
    %c0 = arith.constant 0 : index
    %c0_0 = arith.constant 0 : index
    %0 = vector.load %arg1[%c0, %c0_0] : memref<16x128xf32, #tpu.memory_space<vmem>>, vector<16x128xf32>
    %c0_1 = arith.constant 0 : index
    %c0_2 = arith.constant 0 : index
    %1 = vector.load %arg2[%c0_1, %c0_2] : memref<128x128xf32, #tpu.memory_space<vmem>>, vector<128x128xf32>
    %c0_3 = arith.constant 0 : index
    %c0_4 = arith.constant 0 : index
    %2 = vector.load %arg3[%c0_3, %c0_4] : memref<128x128xf32, #tpu.memory_space<vmem>>, vector<128x128xf32>
    %c0_5 = arith.constant 0 : index
    %c0_6 = arith.constant 0 : index
    %3 = vector.load %arg4[%c0_5, %c0_6] : memref<1x128xf32, #tpu.memory_space<vmem>>, vector<1x128xf32>
    %c0_7 = arith.constant 0 : index
    %c0_8 = arith.constant 0 : index
    %4 = vector.load %arg5[%c0_7, %c0_8] : memref<1x128xf32, #tpu.memory_space<vmem>>, vector<1x128xf32>
    %c0_9 = arith.constant 0 : index
    %c0_10 = arith.constant 0 : index
    %c0_11 = arith.constant 0 : index
    %5 = vector.load %arg6[%c0_9, %c0_10, %c0_11] : memref<1x128x128xbf16, #tpu.memory_space<vmem>>, vector<1x128x128xbf16>
    %6 = vector.shape_cast %5 : vector<1x128x128xbf16> to vector<128x128xbf16>
    %c0_12 = arith.constant 0 : index
    %c0_13 = arith.constant 0 : index
    %c0_14 = arith.constant 0 : index
    %7 = vector.load %arg7[%c0_12, %c0_13, %c0_14] : memref<1x1x128xbf16, #tpu.memory_space<vmem>>, vector<1x1x128xbf16>
    %8 = vector.shape_cast %7 : vector<1x1x128xbf16> to vector<1x128xbf16>
    %9 = arith.extf %6 : vector<128x128xbf16> to vector<128x128xf32>
    %10 = arith.mulf %2, %9 : vector<128x128xf32>
    %11 = arith.addf %1, %10 : vector<128x128xf32>
    %12 = arith.extf %8 : vector<1x128xbf16> to vector<1x128xf32>
    %13 = arith.mulf %4, %12 : vector<1x128xf32>
    %14 = arith.addf %3, %13 : vector<1x128xf32>
    %15 = arith.truncf %0 : vector<16x128xf32> to vector<16x128xbf16>
    %16 = arith.truncf %11 : vector<128x128xf32> to vector<128x128xbf16>
    %cst = arith.constant dense<0.000000e+00> : vector<16x128xf32>
    %17 = tpu.matmul %15, %16, %cst {dimension_numbers = #tpu.dot_dimension_numbers<[1], [0], [0], [1], [0, 0, 1, 1], [], []>} : vector<16x128xbf16>, vector<128x128xbf16>, vector<16x128xf32> -> vector<16x128xf32>
    %18 = vector.broadcast %14 : vector<1x128xf32> to vector<16x128xf32>
    %19 = arith.addf %17, %18 : vector<16x128xf32>
    %cst_15 = arith.constant 0.000000e+00 : f32
    %20 = vector.broadcast %cst_15 : f32 to vector<16x128xf32>
    %21 = arith.maximumf %19, %20 : vector<16x128xf32>
    %c0_16 = arith.constant 0 : index
    %c0_17 = arith.constant 0 : index
    %22 = vector.load %arg8[%c0_16, %c0_17] : memref<128x128xf32, #tpu.memory_space<vmem>>, vector<128x128xf32>
    %c0_18 = arith.constant 0 : index
    %c0_19 = arith.constant 0 : index
    %23 = vector.load %arg9[%c0_18, %c0_19] : memref<128x128xf32, #tpu.memory_space<vmem>>, vector<128x128xf32>
    %c0_20 = arith.constant 0 : index
    %c0_21 = arith.constant 0 : index
    %24 = vector.load %arg10[%c0_20, %c0_21] : memref<1x128xf32, #tpu.memory_space<vmem>>, vector<1x128xf32>
    %c0_22 = arith.constant 0 : index
    %c0_23 = arith.constant 0 : index
    %25 = vector.load %arg11[%c0_22, %c0_23] : memref<1x128xf32, #tpu.memory_space<vmem>>, vector<1x128xf32>
    %c0_24 = arith.constant 0 : index
    %c0_25 = arith.constant 0 : index
    %c0_26 = arith.constant 0 : index
    %26 = vector.load %arg12[%c0_24, %c0_25, %c0_26] : memref<1x128x128xbf16, #tpu.memory_space<vmem>>, vector<1x128x128xbf16>
    %27 = vector.shape_cast %26 : vector<1x128x128xbf16> to vector<128x128xbf16>
    %c0_27 = arith.constant 0 : index
    %c0_28 = arith.constant 0 : index
    %c0_29 = arith.constant 0 : index
    %28 = vector.load %arg13[%c0_27, %c0_28, %c0_29] : memref<1x1x128xbf16, #tpu.memory_space<vmem>>, vector<1x1x128xbf16>
    %29 = vector.shape_cast %28 : vector<1x1x128xbf16> to vector<1x128xbf16>
    %30 = arith.extf %27 : vector<128x128xbf16> to vector<128x128xf32>
    %31 = arith.mulf %23, %30 : vector<128x128xf32>
    %32 = arith.addf %22, %31 : vector<128x128xf32>
    %33 = arith.extf %29 : vector<1x128xbf16> to vector<1x128xf32>
    %34 = arith.mulf %25, %33 : vector<1x128xf32>
    %35 = arith.addf %24, %34 : vector<1x128xf32>
    %36 = arith.truncf %21 : vector<16x128xf32> to vector<16x128xbf16>
    %37 = arith.truncf %32 : vector<128x128xf32> to vector<128x128xbf16>
    %cst_30 = arith.constant dense<0.000000e+00> : vector<16x128xf32>
    %38 = tpu.matmul %36, %37, %cst_30 {dimension_numbers = #tpu.dot_dimension_numbers<[1], [0], [0], [1], [0, 0, 1, 1], [], []>} : vector<16x128xbf16>, vector<128x128xbf16>, vector<16x128xf32> -> vector<16x128xf32>
    %39 = vector.broadcast %35 : vector<1x128xf32> to vector<16x128xf32>
    %40 = arith.addf %38, %39 : vector<16x128xf32>
    %c0_31 = arith.constant 0 : index
    %c0_32 = arith.constant 0 : index
    %c0_33 = arith.constant 0 : index
    %41 = vector.load %arg14[%c0_31, %c0_32, %c0_33] : memref<1x16x128xf32, #tpu.memory_space<vmem>>, vector<1x16x128xf32>
    %42 = vector.shape_cast %41 : vector<1x16x128xf32> to vector<16x128xf32>
    %43 = vector.shape_cast %40 : vector<16x128xf32> to vector<1x16x128xf32>
    tpu.vector_store %arg14[%c0_31, %c0_32, %c0_33], %43 {strides = array<i32>} : memref<1x16x128xf32, #tpu.memory_space<vmem>>, vector<1x16x128xf32>,
    return
  }
  func.func @transform_0(%arg0: i32) -> (i32, i32) {
    %c0_i32 = arith.constant 0 : i32
    %c0_i32_0 = arith.constant 0 : i32
    %c0_i32_1 = arith.constant 0 : i32
    return %c0_i32, %c0_i32_0 : i32, i32
  }
  func.func @transform_1(%arg0: i32) -> (i32, i32) {
    %c0_i32 = arith.constant 0 : i32
    %c0_i32_0 = arith.constant 0 : i32
    %c0_i32_1 = arith.constant 0 : i32
    return %c0_i32, %c0_i32_0 : i32, i32
  }
  func.func @transform_2(%arg0: i32) -> (i32, i32) {
    %c0_i32 = arith.constant 0 : i32
    %c0_i32_0 = arith.constant 0 : i32
    %c0_i32_1 = arith.constant 0 : i32
    return %c0_i32, %c0_i32_0 : i32, i32
  }
  func.func @transform_3(%arg0: i32) -> (i32, i32) {
    %c0_i32 = arith.constant 0 : i32
    %c0_i32_0 = arith.constant 0 : i32
    %c0_i32_1 = arith.constant 0 : i32
    return %c0_i32, %c0_i32_0 : i32, i32
  }
  func.func @transform_4(%arg0: i32) -> (i32, i32) {
    %c0_i32 = arith.constant 0 : i32
    %c0_i32_0 = arith.constant 0 : i32
    %c0_i32_1 = arith.constant 0 : i32
    return %c0_i32, %c0_i32_0 : i32, i32
  }
  func.func @transform_5(%arg0: i32) -> (i32, i32, i32) {
    %c0_i32 = arith.constant 0 : i32
    %c0_i32_0 = arith.constant 0 : i32
    %c0_i32_1 = arith.constant 0 : i32
    return %arg0, %c0_i32, %c0_i32_0 : i32, i32, i32
  }
  func.func @transform_6(%arg0: i32) -> (i32, i32, i32) {
    %c0_i32 = arith.constant 0 : i32
    %c0_i32_0 = arith.constant 0 : i32
    %c0_i32_1 = arith.constant 0 : i32
    return %arg0, %c0_i32, %c0_i32_0 : i32, i32, i32
  }
  func.func @transform_7(%arg0: i32) -> (i32, i32) {
    %c0_i32 = arith.constant 0 : i32
    %c0_i32_0 = arith.constant 0 : i32
    %c0_i32_1 = arith.constant 0 : i32
    return %c0_i32, %c0_i32_0 : i32, i32
  }
  func.func @transform_8(%arg0: i32) -> (i32, i32) {
    %c0_i32 = arith.constant 0 : i32
    %c0_i32_0 = arith.constant 0 : i32
    %c0_i32_1 = arith.constant 0 : i32
    return %c0_i32, %c0_i32_0 : i32, i32
  }
  func.func @transform_9(%arg0: i32) -> (i32, i32) {
    %c0_i32 = arith.constant 0 : i32
    %c0_i32_0 = arith.constant 0 : i32
    %c0_i32_1 = arith.constant 0 : i32
    return %c0_i32, %c0_i32_0 : i32, i32
  }
  func.func @transform_10(%arg0: i32) -> (i32, i32) {
    %c0_i32 = arith.constant 0 : i32
    %c0_i32_0 = arith.constant 0 : i32
    %c0_i32_1 = arith.constant 0 : i32
    return %c0_i32, %c0_i32_0 : i32, i32
  }
  func.func @transform_11(%arg0: i32) -> (i32, i32, i32) {
    %c0_i32 = arith.constant 0 : i32
    %c0_i32_0 = arith.constant 0 : i32
    %c0_i32_1 = arith.constant 0 : i32
    return %arg0, %c0_i32, %c0_i32_0 : i32, i32, i32
  }
  func.func @transform_12(%arg0: i32) -> (i32, i32, i32) {
    %c0_i32 = arith.constant 0 : i32
    %c0_i32_0 = arith.constant 0 : i32
    %c0_i32_1 = arith.constant 0 : i32
    return %arg0, %c0_i32, %c0_i32_0 : i32, i32, i32
  }
  func.func @transform_13(%arg0: i32) -> (i32, i32, i32) {
    %c0_i32 = arith.constant 0 : i32
    %c0_i32_0 = arith.constant 0 : i32
    %c0_i32_1 = arith.constant 0 : i32
    return %arg0, %c0_i32, %c0_i32_0 : i32, i32, i32
  }
}

</mosaic_0001>

<llo_original>
// kernel: bayesian_nn_forward.1
$region0: #{bayesian_nn_forward.1}
  #allocation0 [shape = 'u32[]', space=smem, size = 0x4, offset = 0x4, fixed_abs, tag = 'smem constant byte address 0x4 - core index']
  #allocation1 [shape = 'u32[144,128]{1,0:T(1,128)}', space=vmem, size = 0x12000, scoped, tag = 'internal scratch']
  %s0 = inlined_call_operand.vmem [shape: f32[16,128], index: 0, kind: input, shape index: {}]
  %s1 = inlined_call_operand.hbm [shape: f32[128,128], index: 1, kind: input, shape index: {}]
  %s2 = inlined_call_operand.hbm [shape: f32[128,128], index: 2, kind: input, shape index: {}]
  %s3 = inlined_call_operand.vmem [shape: f32[1,128], index: 3, kind: input, shape index: {}]
  %s4 = inlined_call_operand.vmem [shape: f32[1,128], index: 4, kind: input, shape index: {}]
  %s5 = inlined_call_operand.hbm [shape: bf16[2,128,128], index: 5, kind: input, shape index: {}]
  %s6 = inlined_call_operand.vmem [shape: bf16[2,1,128], index: 6, kind: input, shape index: {}]
  %s7 = inlined_call_operand.hbm [shape: f32[128,128], index: 7, kind: input, shape index: {}]
  %s8 = inlined_call_operand.hbm [shape: f32[128,128], index: 8, kind: input, shape index: {}]
  %s9 = inlined_call_operand.vmem [shape: f32[1,128], index: 9, kind: input, shape index: {}]
  %s10 = inlined_call_operand.vmem [shape: f32[1,128], index: 10, kind: input, shape index: {}]
  %s11 = inlined_call_operand.hbm [shape: bf16[2,128,128], index: 11, kind: input, shape index: {}]
  %s12 = inlined_call_operand.vmem [shape: bf16[2,1,128], index: 12, kind: input, shape index: {}]
  %s13 = inlined_call_operand.vmem [shape: f32[2,16,128], index: 13, kind: output, shape index: {}]
  %s14 = sld [smem:[#allocation0]]
  $region109: #{bayesian_nn_forward.1} parent=0
    _
  %s16 = ssub.s32 1, %s14
  %s17 = scalar_select 0, %s16, %s14
  $region1: #{bayesian_nn_forward.1} parent=0
    #allocation2 [shape = 'u8[65536]{0}', space=vmem, size = 0x10000, scoped, tag = 'input window, operand 1, single buffered']
    #allocation3 [shape = 's32[2]{0}', space=sflag, size = 0x8, scoped, tag = 'scoped memory for bayesian_nn_forward.1']
    #allocation4 [shape = 'u8[65536]{0}', space=vmem, size = 0x10000, scoped, tag = 'input window, operand 2, single buffered']
    #allocation5 [shape = 's32[1]{0}', space=sflag, size = 0x4, scoped, tag = 'scoped memory for bayesian_nn_forward.1']
    #allocation6 [shape = 'u8[65536]{0}', space=vmem, size = 0x10000, scoped, tag = 'input window, operand 5']
    #allocation7 [shape = 'u8[65536]{0}', space=vmem, size = 0x10000, scoped, tag = 'input window, operand 7, single buffered']
    #allocation8 [shape = 'u8[65536]{0}', space=vmem, size = 0x10000, scoped, tag = 'input window, operand 8, single buffered']
    #allocation9 [shape = 's32[1]{0}', space=sflag, size = 0x4, scoped, tag = 'scoped memory for bayesian_nn_forward.1']
    #allocation10 [shape = 'u8[65536]{0}', space=vmem, size = 0x10000, scoped, tag = 'input window, operand 11']
    %18 = vsyncpa [#allocation3], 0
    %19 = vsyncpa [#allocation5], 0
    %20 = vsyncpa [#allocation9], 0
    loop: start=0, step=1, limit=4
    $region2: #{bayesian_nn_forward.1} parent=1 // loop_pre_header
      _
    $region3: #{bayesian_nn_forward.1} parent=1 // loop_header
      %s22 = sphi 0, %s26
      %p23 = scmp.ge.s32.totalorder %s22, 4
      %s30 = sphi 0, %s30
      %s32 = sphi 0, %s30
      %s33 = sphi 0, %s32
      %s47 = sphi 0, %s33
      %s51 = sphi 0, %s51
      %s53 = sphi 0, %s51
      %s54 = sphi 0, %s53
      %s68 = sphi 0, %s54
      %s72 = sphi 0, %s72
      %s74 = sphi 0, %s72
      %s75 = sphi 0, %s74
      %s89 = sphi 0, %s75
      %s93 = sphi 0, %s93
      %s95 = sphi 0, %s93
      %s96 = sphi 0, %s95
      %s110 = sphi 0, %s96
      %s114 = sphi 0, %s114
      %s116 = sphi 0, %s114
      %s117 = sphi 0, %s116
      %s131 = sphi 0, %s117
      %s137 = sphi 0, %s139
      %s140 = sphi 0, %s137
      %s141 = sphi 0, %s140
      %s157 = sphi 0, %s141
      %s163 = sphi 0, %s165
      %s166 = sphi 0, %s163
      %s167 = sphi 0, %s166
      %s183 = sphi 0, %s167
      %s187 = sphi 0, %s187
      %s189 = sphi 0, %s187
      %s190 = sphi 0, %s189
      %s204 = sphi 0, %s190
      %s208 = sphi 0, %s208
      %s210 = sphi 0, %s208
      %s211 = sphi 0, %s210
      %s225 = sphi 0, %s211
      %s229 = sphi 0, %s229
      %s231 = sphi 0, %s229
      %s232 = sphi 0, %s231
      %s246 = sphi 0, %s232
      %s250 = sphi 0, %s250
      %s252 = sphi 0, %s250
      %s253 = sphi 0, %s252
      %s267 = sphi 0, %s253
      %s273 = sphi 0, %s275
      %s276 = sphi 0, %s273
      %s277 = sphi 0, %s276
      %s293 = sphi 0, %s277
      %s299 = sphi 0, %s301
      %s302 = sphi 0, %s299
      %s303 = sphi 0, %s302
      %s319 = sphi 0, %s303
      %s325 = sphi 0, %s327
      %s328 = sphi 0, %s325
      %s329 = sphi 0, %s328
      %s345 = sphi 0, %s329
    $region4: #{bayesian_nn_forward.1} parent=1 // loop_header_branch
      %25 = sbr.rel (%p23) target = $region8
    $region5: #{bayesian_nn_forward.1} parent=1 // loop_body
      %s27 = ssub.s32 %s22, 1
      %s28 = ssub.s32 %s22, 2
      %s29 = sadd.s32 %s22, 1
      %s31 = sadd.s32 %s30, 1
      %p34 = scmp.eq.s32.totalorder %s22, 1
      %p35 = scmp.ne.s32.totalorder %s30, %s32
      %p36 = scmp.eq.s32.totalorder %s22, 0
      %p37 = por %p35, %p36
      %p38 = scmp.ne.s32.totalorder %s30, %s32
      %p39 = scmp.eq.s32.totalorder %s27, 1
      %p40 = por %p38, %p39
      %p41 = scmp.ne.s32.totalorder %s32, %s33
      %p42 = scmp.eq.s32.totalorder %s27, 0
      %p43 = por %p41, %p42
      %p44 = scmp.ne.s32.totalorder %s32, %s33
      %p45 = scmp.eq.s32.totalorder %s28, 1
      %p46 = por %p44, %p45
      %p48 = scmp.ne.s32.totalorder %s33, %s47
      %p49 = scmp.eq.s32.totalorder %s28, 0
      %p50 = por %p48, %p49
      %s52 = sadd.s32 %s51, 1
      %p55 = scmp.eq.s32.totalorder %s22, 1
      %p56 = scmp.ne.s32.totalorder %s51, %s53
      %p57 = scmp.eq.s32.totalorder %s22, 0
      %p58 = por %p56, %p57
      %p59 = scmp.ne.s32.totalorder %s51, %s53
      %p60 = scmp.eq.s32.totalorder %s27, 1
      %p61 = por %p59, %p60
      %p62 = scmp.ne.s32.totalorder %s53, %s54
      %p63 = scmp.eq.s32.totalorder %s27, 0
      %p64 = por %p62, %p63
      %p65 = scmp.ne.s32.totalorder %s53, %s54
      %p66 = scmp.eq.s32.totalorder %s28, 1
      %p67 = por %p65, %p66
      %p69 = scmp.ne.s32.totalorder %s54, %s68
      %p70 = scmp.eq.s32.totalorder %s28, 0
      %p71 = por %p69, %p70
      %s73 = sadd.s32 %s72, 1
      %p76 = scmp.eq.s32.totalorder %s22, 1
      %p77 = scmp.ne.s32.totalorder %s72, %s74
      %p78 = scmp.eq.s32.totalorder %s22, 0
      %p79 = por %p77, %p78
      %p80 = scmp.ne.s32.totalorder %s72, %s74
      %p81 = scmp.eq.s32.totalorder %s27, 1
      %p82 = por %p80, %p81
      %p83 = scmp.ne.s32.totalorder %s74, %s75
      %p84 = scmp.eq.s32.totalorder %s27, 0
      %p85 = por %p83, %p84
      %p86 = scmp.ne.s32.totalorder %s74, %s75
      %p87 = scmp.eq.s32.totalorder %s28, 1
      %p88 = por %p86, %p87
      %p90 = scmp.ne.s32.totalorder %s75, %s89
      %p91 = scmp.eq.s32.totalorder %s28, 0
      %p92 = por %p90, %p91
      %s94 = sadd.s32 %s93, 1
      %p97 = scmp.eq.s32.totalorder %s22, 1
      %p98 = scmp.ne.s32.totalorder %s93, %s95
      %p99 = scmp.eq.s32.totalorder %s22, 0
      %p100 = por %p98, %p99
      %p101 = scmp.ne.s32.totalorder %s93, %s95
      %p102 = scmp.eq.s32.totalorder %s27, 1
      %p103 = por %p101, %p102
      %p104 = scmp.ne.s32.totalorder %s95, %s96
      %p105 = scmp.eq.s32.totalorder %s27, 0
      %p106 = por %p104, %p105
      %p107 = scmp.ne.s32.totalorder %s95, %s96
      %p108 = scmp.eq.s32.totalorder %s28, 1
      %p109 = por %p107, %p108
      %p111 = scmp.ne.s32.totalorder %s96, %s110
      %p112 = scmp.eq.s32.totalorder %s28, 0
      %p113 = por %p111, %p112
      %s115 = sadd.s32 %s114, 1
      %p118 = scmp.eq.s32.totalorder %s22, 1
      %p119 = scmp.ne.s32.totalorder %s114, %s116
      %p120 = scmp.eq.s32.totalorder %s22, 0
      %p121 = por %p119, %p120
      %p122 = scmp.ne.s32.totalorder %s114, %s116
      %p123 = scmp.eq.s32.totalorder %s27, 1
      %p124 = por %p122, %p123
      %p125 = scmp.ne.s32.totalorder %s116, %s117
      %p126 = scmp.eq.s32.totalorder %s27, 0
      %p127 = por %p125, %p126
      %p128 = scmp.ne.s32.totalorder %s116, %s117
      %p129 = scmp.eq.s32.totalorder %s28, 1
      %p130 = por %p128, %p129
      %p132 = scmp.ne.s32.totalorder %s117, %s131
      %p133 = scmp.eq.s32.totalorder %s28, 0
      %p134 = por %p132, %p133
      %s135 = ssub.s32 %s22, %s29
      %p136 = scmp.eq.s32.totalorder %s135, 0
      %s138 = sadd.s32 %s137, 1
      %s139 = scalar_select %p136, %s137, %s138
      %p142 = pneg %p136
      %p143 = scmp.eq.s32.totalorder %s22, 1
      %p144 = por %p142, %p143
      %p145 = scmp.ne.s32.totalorder %s137, %s140
      %p146 = scmp.eq.s32.totalorder %s22, 0
      %p147 = por %p145, %p146
      %p148 = scmp.ne.s32.totalorder %s137, %s140
      %p149 = scmp.eq.s32.totalorder %s27, 1
      %p150 = por %p148, %p149
      %p151 = scmp.ne.s32.totalorder %s140, %s141
      %p152 = scmp.eq.s32.totalorder %s27, 0
      %p153 = por %p151, %p152
      %p154 = scmp.ne.s32.totalorder %s140, %s141
      %p155 = scmp.eq.s32.totalorder %s28, 1
      %p156 = por %p154, %p155
      %p158 = scmp.ne.s32.totalorder %s141, %s157
      %p159 = scmp.eq.s32.totalorder %s28, 0
      %p160 = por %p158, %p159
      %s161 = ssub.s32 %s22, %s29
      %p162 = scmp.eq.s32.totalorder %s161, 0
      %s164 = sadd.s32 %s163, 1
      %s165 = scalar_select %p162, %s163, %s164
      %p168 = pneg %p162
      %p169 = scmp.eq.s32.totalorder %s22, 1
      %p170 = por %p168, %p169
      %p171 = scmp.ne.s32.totalorder %s163, %s166
      %p172 = scmp.eq.s32.totalorder %s22, 0
      %p173 = por %p171, %p172
      %p174 = scmp.ne.s32.totalorder %s163, %s166
      %p175 = scmp.eq.s32.totalorder %s27, 1
      %p176 = por %p174, %p175
      %p177 = scmp.ne.s32.totalorder %s166, %s167
      %p178 = scmp.eq.s32.totalorder %s27, 0
      %p179 = por %p177, %p178
      %p180 = scmp.ne.s32.totalorder %s166, %s167
      %p181 = scmp.eq.s32.totalorder %s28, 1
      %p182 = por %p180, %p181
      %p184 = scmp.ne.s32.totalorder %s167, %s183
      %p185 = scmp.eq.s32.totalorder %s28, 0
      %p186 = por %p184, %p185
      %s188 = sadd.s32 %s187, 1
      %p191 = scmp.eq.s32.totalorder %s22, 1
      %p192 = scmp.ne.s32.totalorder %s187, %s189
      %p193 = scmp.eq.s32.totalorder %s22, 0
      %p194 = por %p192, %p193
      %p195 = scmp.ne.s32.totalorder %s187, %s189
      %p196 = scmp.eq.s32.totalorder %s27, 1
      %p197 = por %p195, %p196
      %p198 = scmp.ne.s32.totalorder %s189, %s190
      %p199 = scmp.eq.s32.totalorder %s27, 0
      %p200 = por %p198, %p199
      %p201 = scmp.ne.s32.totalorder %s189, %s190
      %p202 = scmp.eq.s32.totalorder %s28, 1
      %p203 = por %p201, %p202
      %p205 = scmp.ne.s32.totalorder %s190, %s204
      %p206 = scmp.eq.s32.totalorder %s28, 0
      %p207 = por %p205, %p206
      %s209 = sadd.s32 %s208, 1
      %p212 = scmp.eq.s32.totalorder %s22, 1
      %p213 = scmp.ne.s32.totalorder %s208, %s210
      %p214 = scmp.eq.s32.totalorder %s22, 0
      %p215 = por %p213, %p214
      %p216 = scmp.ne.s32.totalorder %s208, %s210
      %p217 = scmp.eq.s32.totalorder %s27, 1
      %p218 = por %p216, %p217
      %p219 = scmp.ne.s32.totalorder %s210, %s211
      %p220 = scmp.eq.s32.totalorder %s27, 0
      %p221 = por %p219, %p220
      %p222 = scmp.ne.s32.totalorder %s210, %s211
      %p223 = scmp.eq.s32.totalorder %s28, 1
      %p224 = por %p222, %p223
      %p226 = scmp.ne.s32.totalorder %s211, %s225
      %p227 = scmp.eq.s32.totalorder %s28, 0
      %p228 = por %p226, %p227
      %s230 = sadd.s32 %s229, 1
      %p233 = scmp.eq.s32.totalorder %s22, 1
      %p234 = scmp.ne.s32.totalorder %s229, %s231
      %p235 = scmp.eq.s32.totalorder %s22, 0
      %p236 = por %p234, %p235
      %p237 = scmp.ne.s32.totalorder %s229, %s231
      %p238 = scmp.eq.s32.totalorder %s27, 1
      %p239 = por %p237, %p238
      %p240 = scmp.ne.s32.totalorder %s231, %s232
      %p241 = scmp.eq.s32.totalorder %s27, 0
      %p242 = por %p240, %p241
      %p243 = scmp.ne.s32.totalorder %s231, %s232
      %p244 = scmp.eq.s32.totalorder %s28, 1
      %p245 = por %p243, %p244
      %p247 = scmp.ne.s32.totalorder %s232, %s246
      %p248 = scmp.eq.s32.totalorder %s28, 0
      %p249 = por %p247, %p248
      %s251 = sadd.s32 %s250, 1
      %p254 = scmp.eq.s32.totalorder %s22, 1
      %p255 = scmp.ne.s32.totalorder %s250, %s252
      %p256 = scmp.eq.s32.totalorder %s22, 0
      %p257 = por %p255, %p256
      %p258 = scmp.ne.s32.totalorder %s250, %s252
      %p259 = scmp.eq.s32.totalorder %s27, 1
      %p260 = por %p258, %p259
      %p261 = scmp.ne.s32.totalorder %s252, %s253
      %p262 = scmp.eq.s32.totalorder %s27, 0
      %p263 = por %p261, %p262
      %p264 = scmp.ne.s32.totalorder %s252, %s253
      %p265 = scmp.eq.s32.totalorder %s28, 1
      %p266 = por %p264, %p265
      %p268 = scmp.ne.s32.totalorder %s253, %s267
      %p269 = scmp.eq.s32.totalorder %s28, 0
      %p270 = por %p268, %p269
      %s271 = ssub.s32 %s22, %s29
      %p272 = scmp.eq.s32.totalorder %s271, 0
      %s274 = sadd.s32 %s273, 1
      %s275 = scalar_select %p272, %s273, %s274
      %p278 = pneg %p272
      %p279 = scmp.eq.s32.totalorder %s22, 1
      %p280 = por %p278, %p279
      %p281 = scmp.ne.s32.totalorder %s273, %s276
      %p282 = scmp.eq.s32.totalorder %s22, 0
      %p283 = por %p281, %p282
      %p284 = scmp.ne.s32.totalorder %s273, %s276
      %p285 = scmp.eq.s32.totalorder %s27, 1
      %p286 = por %p284, %p285
      %p287 = scmp.ne.s32.totalorder %s276, %s277
      %p288 = scmp.eq.s32.totalorder %s27, 0
      %p289 = por %p287, %p288
      %p290 = scmp.ne.s32.totalorder %s276, %s277
      %p291 = scmp.eq.s32.totalorder %s28, 1
      %p292 = por %p290, %p291
      %p294 = scmp.ne.s32.totalorder %s277, %s293
      %p295 = scmp.eq.s32.totalorder %s28, 0
      %p296 = por %p294, %p295
      %s297 = ssub.s32 %s22, %s29
      %p298 = scmp.eq.s32.totalorder %s297, 0
      %s300 = sadd.s32 %s299, 1
      %s301 = scalar_select %p298, %s299, %s300
      %p304 = pneg %p298
      %p305 = scmp.eq.s32.totalorder %s22, 1
      %p306 = por %p304, %p305
      %p307 = scmp.ne.s32.totalorder %s299, %s302
      %p308 = scmp.eq.s32.totalorder %s22, 0
      %p309 = por %p307, %p308
      %p310 = scmp.ne.s32.totalorder %s299, %s302
      %p311 = scmp.eq.s32.totalorder %s27, 1
      %p312 = por %p310, %p311
      %p313 = scmp.ne.s32.totalorder %s302, %s303
      %p314 = scmp.eq.s32.totalorder %s27, 0
      %p315 = por %p313, %p314
      %p316 = scmp.ne.s32.totalorder %s302, %s303
      %p317 = scmp.eq.s32.totalorder %s28, 1
      %p318 = por %p316, %p317
      %p320 = scmp.ne.s32.totalorder %s303, %s319
      %p321 = scmp.eq.s32.totalorder %s28, 0
      %p322 = por %p320, %p321
      %s323 = ssub.s32 %s22, %s29
      %p324 = scmp.eq.s32.totalorder %s323, 0
      %s326 = sadd.s32 %s325, 1
      %s327 = scalar_select %p324, %s325, %s326
      %p330 = pneg %p324
      %p331 = scmp.eq.s32.totalorder %s22, 1
      %p332 = por %p330, %p331
      %p333 = scmp.ne.s32.totalorder %s325, %s328
      %p334 = scmp.eq.s32.totalorder %s22, 0
      %p335 = por %p333, %p334
      %p336 = scmp.ne.s32.totalorder %s325, %s328
      %p337 = scmp.eq.s32.totalorder %s27, 1
      %p338 = por %p336, %p337
      %p339 = scmp.ne.s32.totalorder %s328, %s329
      %p340 = scmp.eq.s32.totalorder %s27, 0
      %p341 = por %p339, %p340
      %p342 = scmp.ne.s32.totalorder %s328, %s329
      %p343 = scmp.eq.s32.totalorder %s28, 1
      %p344 = por %p342, %p343
      %p346 = scmp.ne.s32.totalorder %s329, %s345
      %p347 = scmp.eq.s32.totalorder %s28, 0
      %p348 = por %p346, %p347
      %p349 = scmp.le.s32.totalorder 1, %s22
      %p350 = scmp.lt.s32.totalorder %s22, 3
      %p351 = pnand %p349, %p350
      %p352 = pneg %p351
      // Predicated region
      $region9: #{bayesian_nn_forward.1} parent=5 // pred_check
        _
      $region10: #{bayesian_nn_forward.1} parent=5 // pred_check_branch
        %354 = sbr.rel (%p351) target = $region12
      $region11: #{bayesian_nn_forward.1} parent=5 // pred_region
        %s355 = ssub.s32 %s22, 1
        // Predicated region
        $region13: #{bayesian_nn_forward.1} parent=11 // pred_check
          %p356 = pneg %p43
        $region14: #{bayesian_nn_forward.1} parent=11 // pred_check_branch
          %358 = sbr.rel (%p356) target = $region16
        $region15: #{bayesian_nn_forward.1} parent=11 // pred_region
          _
        $region16: #{bayesian_nn_forward.1} parent=11 // pred_fallthru
          _
        // Predicated region
        $region17: #{bayesian_nn_forward.1} parent=11 // pred_check
          %p359 = pneg %p64
        $region18: #{bayesian_nn_forward.1} parent=11 // pred_check_branch
          %361 = sbr.rel (%p359) target = $region20
        $region19: #{bayesian_nn_forward.1} parent=11 // pred_region
          %s363 = ssub.s32 2048, 2048
          %364 = vsyncadd [#allocation3], %s363
          %s365 = sshll.u32 [#allocation2], 4
          %s366 = int_to_ptr.vmem [resolvable:$true] %s365
          %371 = dma.hbm_to_vmem [thread:$0]  %s1, 2048, %s366, [#allocation3], 128, 128, 8
        $region20: #{bayesian_nn_forward.1} parent=11 // pred_fallthru
          _
        // Predicated region
        $region21: #{bayesian_nn_forward.1} parent=11 // pred_check
          %p372 = pneg %p85
        $region22: #{bayesian_nn_forward.1} parent=11 // pred_check_branch
          %374 = sbr.rel (%p372) target = $region24
        $region23: #{bayesian_nn_forward.1} parent=11 // pred_region
          %s376 = ssub.s32 2048, 2048
          %377 = vsyncadd [#allocation5], %s376
          %s378 = sshll.u32 [#allocation4], 4
          %s379 = int_to_ptr.vmem [resolvable:$true] %s378
          %384 = dma.hbm_to_vmem [thread:$0]  %s2, 2048, %s379, [#allocation5], 128, 128, 8
        $region24: #{bayesian_nn_forward.1} parent=11 // pred_fallthru
          _
        // Predicated region
        $region25: #{bayesian_nn_forward.1} parent=11 // pred_check
          %p385 = pneg %p106
        $region26: #{bayesian_nn_forward.1} parent=11 // pred_check_branch
          %387 = sbr.rel (%p385) target = $region28
        $region27: #{bayesian_nn_forward.1} parent=11 // pred_region
          _
        $region28: #{bayesian_nn_forward.1} parent=11 // pred_fallthru
          _
        // Predicated region
        $region29: #{bayesian_nn_forward.1} parent=11 // pred_check
          %p388 = pneg %p127
        $region30: #{bayesian_nn_forward.1} parent=11 // pred_check_branch
          %390 = sbr.rel (%p388) target = $region32
        $region31: #{bayesian_nn_forward.1} parent=11 // pred_region
          _
        $region32: #{bayesian_nn_forward.1} parent=11 // pred_fallthru
          _
        // Predicated region
        $region33: #{bayesian_nn_forward.1} parent=11 // pred_check
          %p391 = pneg %p200
        $region34: #{bayesian_nn_forward.1} parent=11 // pred_check_branch
          %393 = sbr.rel (%p391) target = $region36
        $region35: #{bayesian_nn_forward.1} parent=11 // pred_region
          %s395 = ssub.s32 2048, 2048
          %396 = vsyncadd [#allocation5], %s395
          %s397 = sshll.u32 [#allocation7], 4
          %s398 = int_to_ptr.vmem [resolvable:$true] %s397
          %403 = dma.hbm_to_vmem [thread:$0]  %s7, 2048, %s398, [#allocation5], 128, 128, 8
        $region36: #{bayesian_nn_forward.1} parent=11 // pred_fallthru
          _
        // Predicated region
        $region37: #{bayesian_nn_forward.1} parent=11 // pred_check
          %p404 = pneg %p221
        $region38: #{bayesian_nn_forward.1} parent=11 // pred_check_branch
          %406 = sbr.rel (%p404) target = $region40
        $region39: #{bayesian_nn_forward.1} parent=11 // pred_region
          %s408 = ssub.s32 2048, 2048
          %409 = vsyncadd [#allocation9], %s408
          %s410 = sshll.u32 [#allocation8], 4
          %s411 = int_to_ptr.vmem [resolvable:$true] %s410
          %416 = dma.hbm_to_vmem [thread:$0]  %s8, 2048, %s411, [#allocation9], 128, 128, 8
        $region40: #{bayesian_nn_forward.1} parent=11 // pred_fallthru
          _
        // Predicated region
        $region41: #{bayesian_nn_forward.1} parent=11 // pred_check
          %p417 = pneg %p242
        $region42: #{bayesian_nn_forward.1} parent=11 // pred_check_branch
          %419 = sbr.rel (%p417) target = $region44
        $region43: #{bayesian_nn_forward.1} parent=11 // pred_region
          _
        $region44: #{bayesian_nn_forward.1} parent=11 // pred_fallthru
          _
        // Predicated region
        $region45: #{bayesian_nn_forward.1} parent=11 // pred_check
          %p420 = pneg %p263
        $region46: #{bayesian_nn_forward.1} parent=11 // pred_check_branch
          %422 = sbr.rel (%p420) target = $region48
        $region47: #{bayesian_nn_forward.1} parent=11 // pred_region
          _
        $region48: #{bayesian_nn_forward.1} parent=11 // pred_fallthru
          _
      $region12: #{bayesian_nn_forward.1} parent=5 // pred_fallthru
        _
      %p423 = scmp.lt.s32.totalorder %s22, 2
      // Predicated region
      $region49: #{bayesian_nn_forward.1} parent=5 // pred_check
        %p424 = pneg %p423
      $region50: #{bayesian_nn_forward.1} parent=5 // pred_check_branch
        %426 = sbr.rel (%p424) target = $region52
      $region51: #{bayesian_nn_forward.1} parent=5 // pred_region
        // Predicated region
        $region53: #{bayesian_nn_forward.1} parent=51 // pred_check
          %p427 = pneg %p147
        $region54: #{bayesian_nn_forward.1} parent=51 // pred_check_branch
          %429 = sbr.rel (%p427) target = $region56
        $region55: #{bayesian_nn_forward.1} parent=51 // pred_region
          %s430 = sand.u32 %s22, 1
          %s431 = scalar_lea.sflag [#allocation3], %s430
          %s432 = sand.u32 %s137, 1
          %s433 = smul.addr %s432, 64
          %s434 = scalar_lea.vmem [#allocation6], %s433
          %s436 = ssub.s32 1024, 1024
          %437 = vsyncadd %s431, %s436
          %s438 = smul.addr %s22, 16
          %s439 = smul.addr %s438, 64
          %s440 = scalar_lea.hbm %s5, %s439
          %s441 = sshll.u32 %s434, 4
          %s442 = int_to_ptr.vmem [resolvable:$true] %s441
          %447 = dma.hbm_to_vmem [thread:$0]  %s440, 1024, %s442, %s431, 64, 64, 4
        $region56: #{bayesian_nn_forward.1} parent=51 // pred_fallthru
          _
        // Predicated region
        $region57: #{bayesian_nn_forward.1} parent=51 // pred_check
          %p448 = pneg %p173
        $region58: #{bayesian_nn_forward.1} parent=51 // pred_check_branch
          %450 = sbr.rel (%p448) target = $region60
        $region59: #{bayesian_nn_forward.1} parent=51 // pred_region
          %p451 = scmp.lt.s32.totalorder %s22, 1
          %s452 = scalar_select %p451, %s22, 1
          %s453 = scalar_lea.vmem %s6, %s452
        $region60: #{bayesian_nn_forward.1} parent=51 // pred_fallthru
          _
        // Predicated region
        $region61: #{bayesian_nn_forward.1} parent=51 // pred_check
          %p454 = pneg %p283
        $region62: #{bayesian_nn_forward.1} parent=51 // pred_check_branch
          %456 = sbr.rel (%p454) target = $region64
        $region63: #{bayesian_nn_forward.1} parent=51 // pred_region
          %s457 = sand.u32 %s22, 1
          %s458 = scalar_lea.sflag [#allocation3], %s457
          %s459 = sand.u32 %s273, 1
          %s460 = smul.addr %s459, 64
          %s461 = scalar_lea.vmem [#allocation10], %s460
          %s463 = ssub.s32 1024, 1024
          %464 = vsyncadd %s458, %s463
          %s465 = smul.addr %s22, 16
          %s466 = smul.addr %s465, 64
          %s467 = scalar_lea.hbm %s11, %s466
          %s468 = sshll.u32 %s461, 4
          %s469 = int_to_ptr.vmem [resolvable:$true] %s468
          %474 = dma.hbm_to_vmem [thread:$0]  %s467, 1024, %s469, %s458, 64, 64, 4
        $region64: #{bayesian_nn_forward.1} parent=51 // pred_fallthru
          _
        // Predicated region
        $region65: #{bayesian_nn_forward.1} parent=51 // pred_check
          %p475 = pneg %p309
        $region66: #{bayesian_nn_forward.1} parent=51 // pred_check_branch
          %477 = sbr.rel (%p475) target = $region68
        $region67: #{bayesian_nn_forward.1} parent=51 // pred_region
          %p478 = scmp.lt.s32.totalorder %s22, 1
          %s479 = scalar_select %p478, %s22, 1
          %s480 = scalar_lea.vmem %s12, %s479
        $region68: #{bayesian_nn_forward.1} parent=51 // pred_fallthru
          _
      $region52: #{bayesian_nn_forward.1} parent=5 // pred_fallthru
        _
      %p481 = scmp.le.s32.totalorder 1, %s22
      %p482 = scmp.lt.s32.totalorder %s22, 3
      %p483 = pnand %p481, %p482
      %p484 = pneg %p483
      // Predicated region
      $region69: #{bayesian_nn_forward.1} parent=5 // pred_check
        _
      $region70: #{bayesian_nn_forward.1} parent=5 // pred_check_branch
        %486 = sbr.rel (%p483) target = $region72
      $region71: #{bayesian_nn_forward.1} parent=5 // pred_region
        %s487 = ssub.s32 %s22, 1
        // Predicated region
        $region73: #{bayesian_nn_forward.1} parent=71 // pred_check
          %p488 = pneg %p64
        $region74: #{bayesian_nn_forward.1} parent=71 // pred_check_branch
          %490 = sbr.rel (%p488) target = $region76
        $region75: #{bayesian_nn_forward.1} parent=71 // pred_region
          %491 = dma.done [#allocation3], 2048
        $region76: #{bayesian_nn_forward.1} parent=71 // pred_fallthru
          _
        // Predicated region
        $region77: #{bayesian_nn_forward.1} parent=71 // pred_check
          %p492 = pneg %p85
        $region78: #{bayesian_nn_forward.1} parent=71 // pred_check_branch
          %494 = sbr.rel (%p492) target = $region80
        $region79: #{bayesian_nn_forward.1} parent=71 // pred_region
          %495 = dma.done [#allocation5], 2048
        $region80: #{bayesian_nn_forward.1} parent=71 // pred_fallthru
          _
        %s496 = sand.u32 %s27, 1
        %s497 = scalar_lea.sflag [#allocation3], %s496
        %s498 = sand.u32 %s140, 1
        %s499 = smul.addr %s498, 64
        %s500 = scalar_lea.vmem [#allocation6], %s499
        // Predicated region
        $region81: #{bayesian_nn_forward.1} parent=71 // pred_check
          %p501 = pneg %p153
        $region82: #{bayesian_nn_forward.1} parent=71 // pred_check_branch
          %503 = sbr.rel (%p501) target = $region84
        $region83: #{bayesian_nn_forward.1} parent=71 // pred_region
          %504 = dma.done %s497, 1024
        $region84: #{bayesian_nn_forward.1} parent=71 // pred_fallthru
          _
        // Predicated region
        $region85: #{bayesian_nn_forward.1} parent=71 // pred_check
          %p505 = pneg %p200
        $region86: #{bayesian_nn_forward.1} parent=71 // pred_check_branch
          %507 = sbr.rel (%p505) target = $region88
        $region87: #{bayesian_nn_forward.1} parent=71 // pred_region
          %508 = dma.done [#allocation5], 2048
        $region88: #{bayesian_nn_forward.1} parent=71 // pred_fallthru
          _
        // Predicated region
        $region89: #{bayesian_nn_forward.1} parent=71 // pred_check
          %p509 = pneg %p221
        $region90: #{bayesian_nn_forward.1} parent=71 // pred_check_branch
          %511 = sbr.rel (%p509) target = $region92
        $region91: #{bayesian_nn_forward.1} parent=71 // pred_region
          %512 = dma.done [#allocation9], 2048
        $region92: #{bayesian_nn_forward.1} parent=71 // pred_fallthru
          _
        %s513 = sand.u32 %s27, 1
        %s514 = scalar_lea.sflag [#allocation3], %s513
        %s515 = sand.u32 %s276, 1
        %s516 = smul.addr %s515, 64
        %s517 = scalar_lea.vmem [#allocation10], %s516
        // Predicated region
        $region93: #{bayesian_nn_forward.1} parent=71 // pred_check
          %p518 = pneg %p289
        $region94: #{bayesian_nn_forward.1} parent=71 // pred_check_branch
          %520 = sbr.rel (%p518) target = $region96
        $region95: #{bayesian_nn_forward.1} parent=71 // pred_region
          %521 = dma.done %s514, 1024
        $region96: #{bayesian_nn_forward.1} parent=71 // pred_fallthru
          _
        %p522 = pneg %p43
        %p523 = pneg %p40
        %p524 = pneg %p64
        %p525 = pneg %p61
        %p526 = pneg %p85
        %p527 = pneg %p82
        %p528 = pneg %p106
        %p529 = pneg %p103
        %p530 = pneg %p127
        %p531 = pneg %p124
        %s532 = sand.u32 %s27, 1
        %s533 = scalar_lea.sflag [#allocation3], %s532
        %s534 = sand.u32 %s140, 1
        %s535 = smul.addr %s534, 64
        %s536 = scalar_lea.vmem [#allocation6], %s535
        %p537 = pneg %p153
        %p538 = pneg %p150
        %p539 = scmp.lt.s32.totalorder %s27, 1
        %s540 = scalar_select %p539, %s27, 1
        %s541 = scalar_lea.vmem %s6, %s540
        %p542 = pneg %p179
        %p543 = pneg %p176
        %p544 = pneg %p200
        %p545 = pneg %p197
        %p546 = pneg %p221
        %p547 = pneg %p218
        %p548 = pneg %p242
        %p549 = pneg %p239
        %p550 = pneg %p263
        %p551 = pneg %p260
        %s552 = sand.u32 %s27, 1
        %s553 = scalar_lea.sflag [#allocation3], %s552
        %s554 = sand.u32 %s276, 1
        %s555 = smul.addr %s554, 64
        %s556 = scalar_lea.vmem [#allocation10], %s555
        %p557 = pneg %p289
        %p558 = pneg %p286
        %p559 = scmp.lt.s32.totalorder %s27, 1
        %s560 = scalar_select %p559, %s27, 1
        %s561 = scalar_lea.vmem %s12, %s560
        %p562 = pneg %p315
        %p563 = pneg %p312
        %p564 = pneg %p341
        %p565 = pneg %p338
        %p566 = scmp.lt.s32.totalorder %s27, 1
        %s567 = scalar_select %p566, %s27, 1
        %s568 = smul.addr %s567, 2
        %s569 = smul.addr %s568, 8
        %s570 = scalar_lea.vmem %s13, %s569
        %p571 = scmp.lt.s32.totalorder %s27, 1
        %s572 = scalar_select %p571, %s27, 1
        %s573 = scalar_lea.vmem %s6, %s572
        %p574 = scmp.lt.s32.totalorder %s27, 1
        %s575 = scalar_select %p574, %s27, 1
        %s576 = scalar_lea.vmem %s12, %s575
        %p577 = scmp.lt.s32.totalorder %s27, 1
        %s578 = scalar_select %p577, %s27, 1
        %s579 = smul.addr %s578, 2
        %s580 = smul.addr %s579, 8
        %s581 = scalar_lea.vmem %s13, %s580
        %v583 = vld [vmem:[%s0] sm:$0xff]
        %v584 = vld [vmem:[%s0 + $0x8] sm:$0xff]
        %v585 = vld [vmem:[#allocation2] sm:$0xff]
        %v586 = vld [vmem:[#allocation2 + $0x8] sm:$0xff]
        %v587 = vld [vmem:[#allocation2 + $0x10] sm:$0xff]
        %v588 = vld [vmem:[#allocation2 + $0x18] sm:$0xff]
        %v589 = vld [vmem:[#allocation2 + $0x20] sm:$0xff]
        %v590 = vld [vmem:[#allocation2 + $0x28] sm:$0xff]
        %v591 = vld [vmem:[#allocation2 + $0x30] sm:$0xff]
        %v592 = vld [vmem:[#allocation2 + $0x38] sm:$0xff]
        %v593 = vld [vmem:[#allocation2 + $0x40] sm:$0xff]
        %v594 = vld [vmem:[#allocation2 + $0x48] sm:$0xff]
        %v595 = vld [vmem:[#allocation2 + $0x50] sm:$0xff]
        %v596 = vld [vmem:[#allocation2 + $0x58] sm:$0xff]
        %v597 = vld [vmem:[#allocation2 + $0x60] sm:$0xff]
        %v598 = vld [vmem:[#allocation2 + $0x68] sm:$0xff]
        %v599 = vld [vmem:[#allocation2 + $0x70] sm:$0xff]
        %v600 = vld [vmem:[#allocation2 + $0x78] sm:$0xff]
        %v601 = vld [vmem:[#allocation4] sm:$0xff]
        %v602 = vld [vmem:[#allocation4 + $0x8] sm:$0xff]
        %v603 = vld [vmem:[#allocation4 + $0x10] sm:$0xff]
        %v604 = vld [vmem:[#allocation4 + $0x18] sm:$0xff]
        %v605 = vld [vmem:[#allocation4 + $0x20] sm:$0xff]
        %v606 = vld [vmem:[#allocation4 + $0x28] sm:$0xff]
        %v607 = vld [vmem:[#allocation4 + $0x30] sm:$0xff]
        %v608 = vld [vmem:[#allocation4 + $0x38] sm:$0xff]
        %v609 = vld [vmem:[#allocation4 + $0x40] sm:$0xff]
        %v610 = vld [vmem:[#allocation4 + $0x48] sm:$0xff]
        %v611 = vld [vmem:[#allocation4 + $0x50] sm:$0xff]
        %v612 = vld [vmem:[#allocation4 + $0x58] sm:$0xff]
        %v613 = vld [vmem:[#allocation4 + $0x60] sm:$0xff]
        %v614 = vld [vmem:[#allocation4 + $0x68] sm:$0xff]
        %v615 = vld [vmem:[#allocation4 + $0x70] sm:$0xff]
        %v616 = vld [vmem:[#allocation4 + $0x78] sm:$0xff]
        %v617 = vld [vmem:[%s3] sm:$0x1]
        %v618 = vld [vmem:[%s4] sm:$0x1]
        %v619 = vld [vmem:[%s500] sm:$0xf]
        %v620 = vld [vmem:[%s500 + $0x4] sm:$0xf]
        %v621 = vld [vmem:[%s500 + $0x8] sm:$0xf]
        %v622 = vld [vmem:[%s500 + $0xc] sm:$0xf]
        %v623 = vld [vmem:[%s500 + $0x10] sm:$0xf]
        %v624 = vld [vmem:[%s500 + $0x14] sm:$0xf]
        %v625 = vld [vmem:[%s500 + $0x18] sm:$0xf]
        %v626 = vld [vmem:[%s500 + $0x1c] sm:$0xf]
        %v627 = vld [vmem:[%s500 + $0x20] sm:$0xf]
        %v628 = vld [vmem:[%s500 + $0x24] sm:$0xf]
        %v629 = vld [vmem:[%s500 + $0x28] sm:$0xf]
        %v630 = vld [vmem:[%s500 + $0x2c] sm:$0xf]
        %v631 = vld [vmem:[%s500 + $0x30] sm:$0xf]
        %v632 = vld [vmem:[%s500 + $0x34] sm:$0xf]
        %v633 = vld [vmem:[%s500 + $0x38] sm:$0xf]
        %v634 = vld [vmem:[%s500 + $0x3c] sm:$0xf]
        %v635 = vld [vmem:[%s573] sm:$0x1]
        %v636 = vunpack.c.l.bf16 %v619
        %v637 = vunpack.c.l.bf16 %v620
        %v638 = vunpack.c.l.bf16 %v621
        %v639 = vunpack.c.l.bf16 %v622
        %v640 = vunpack.c.l.bf16 %v623
        %v641 = vunpack.c.l.bf16 %v624
        %v642 = vunpack.c.l.bf16 %v625
        %v643 = vunpack.c.l.bf16 %v626
        %v644 = vunpack.c.l.bf16 %v627
        %v645 = vunpack.c.l.bf16 %v628
        %v646 = vunpack.c.l.bf16 %v629
        %v647 = vunpack.c.l.bf16 %v630
        %v648 = vunpack.c.l.bf16 %v631
        %v649 = vunpack.c.l.bf16 %v632
        %v650 = vunpack.c.l.bf16 %v633
        %v651 = vunpack.c.l.bf16 %v634
        %v652 = vmul.f32 %v601, %v636
        %v653 = vmul.f32 %v602, %v637
        %v654 = vmul.f32 %v603, %v638
        %v655 = vmul.f32 %v604, %v639
        %v656 = vmul.f32 %v605, %v640
        %v657 = vmul.f32 %v606, %v641
        %v658 = vmul.f32 %v607, %v642
        %v659 = vmul.f32 %v608, %v643
        %v660 = vmul.f32 %v609, %v644
        %v661 = vmul.f32 %v610, %v645
        %v662 = vmul.f32 %v611, %v646
        %v663 = vmul.f32 %v612, %v647
        %v664 = vmul.f32 %v613, %v648
        %v665 = vmul.f32 %v614, %v649
        %v666 = vmul.f32 %v615, %v650
        %v667 = vmul.f32 %v616, %v651
        %v668 = vadd.f32 %v585, %v652
        %v669 = vadd.f32 %v586, %v653
        %v670 = vadd.f32 %v587, %v654
        %v671 = vadd.f32 %v588, %v655
        %v672 = vadd.f32 %v589, %v656
        %v673 = vadd.f32 %v590, %v657
        %v674 = vadd.f32 %v591, %v658
        %v675 = vadd.f32 %v592, %v659
        %v676 = vadd.f32 %v593, %v660
        %v677 = vadd.f32 %v594, %v661
        %v678 = vadd.f32 %v595, %v662
        %v679 = vadd.f32 %v596, %v663
        %v680 = vadd.f32 %v597, %v664
        %v681 = vadd.f32 %v598, %v665
        %v682 = vadd.f32 %v599, %v666
        %v683 = vadd.f32 %v600, %v667
        %v684 = vunpack.c.l.bf16 %v635
        %v685 = vmul.f32 %v618, %v684
        %v686 = vadd.f32 %v617, %v685
        %v687 = vpack.c.bf16 %v584, %v583
        %v688 = vpack.c.bf16 %v669, %v668
        %v689 = vpack.c.bf16 %v671, %v670
        %v690 = vpack.c.bf16 %v673, %v672
        %v691 = vpack.c.bf16 %v675, %v674
        %v692 = vpack.c.bf16 %v677, %v676
        %v693 = vpack.c.bf16 %v679, %v678
        %v694 = vpack.c.bf16 %v681, %v680
        %v695 = vpack.c.bf16 %v683, %v682
        %v697 = vlaneseq
        %v698 = vshrl.u32 %v697, 7
        %v699 = vsub.s32 0, %v698
        %v700 = vrot.slane %v686, %v699
        %702 = vmatprep.subr.bf16.mxu0 0
        %703 = vmatpush1.bf16.msra.mxu0 %v688
        %704 = vmatprep.subr.bf16.mxu0 0
        %705 = vmatpush1.bf16.msra.mxu0 %v689
        %706 = vmatprep.subr.bf16.mxu0 0
        %707 = vmatpush1.bf16.msra.mxu0 %v690
        %708 = vmatprep.subr.bf16.mxu0 0
        %709 = vmatpush1.bf16.msra.mxu0 %v691
        %710 = vmatprep.subr.bf16.mxu0 0
        %711 = vmatpush1.bf16.msra.mxu0 %v692
        %712 = vmatprep.subr.bf16.mxu0 0
        %713 = vmatpush1.bf16.msra.mxu0 %v693
        %714 = vmatprep.subr.bf16.mxu0 0
        %715 = vmatpush1.bf16.msra.mxu0 %v694
        %716 = vmatprep.subr.bf16.mxu0 0
        %717 = vmatpush1.bf16.msra.mxu0 %v695
        %718 = vmatprep.subr.bf16.mxu0 0
        %719 = vmatpush1.bf16.msra.mxu0 0
        %720 = vmatprep.subr.bf16.mxu0 0
        %721 = vmatpush1.bf16.msra.mxu0 0
        %722 = vmatprep.subr.bf16.mxu0 0
        %723 = vmatpush1.bf16.msra.mxu0 0
        %724 = vmatprep.subr.bf16.mxu0 0
        %725 = vmatpush1.bf16.msra.mxu0 0
        %726 = vmatprep.subr.bf16.mxu0 0
        %727 = vmatpush1.bf16.msra.mxu0 0
        %728 = vmatprep.subr.bf16.mxu0 0
        %729 = vmatpush1.bf16.msra.mxu0 0
        %730 = vmatprep.subr.bf16.mxu0 0
        %731 = vmatpush1.bf16.msra.mxu0 0
        %732 = vmatprep.subr.bf16.mxu0 0
        %733 = vmatpush1.bf16.msra.mxu0 0
        %734 = vmatprep.mubr.bf16.mxu0 0
        %735 = vmatmul.mubr.bf16.gmra.mrb[0].mxu0 %v687
        %v736 = vpop.f32.mrb[0].mxu0
        %v737 = vadd.f32 %v700, %v736
        %v738 = vpop.f32.mrb[0].mxu0
        %v739 = vpop.f32.mrb[0].mxu0
        %v740 = vadd.f32 %v700, %v739
        %v741 = vpop.f32.mrb[0].mxu0
        %742 = vdwg.mxu0
        %v743 = vmax.f32 %v737, 0.0
        %v744 = vmax.f32 %v740, 0.0
        %v745 = vld [vmem:[#allocation7] sm:$0xff]
        %v746 = vld [vmem:[#allocation7 + $0x8] sm:$0xff]
        %v747 = vld [vmem:[#allocation7 + $0x10] sm:$0xff]
        %v748 = vld [vmem:[#allocation7 + $0x18] sm:$0xff]
        %v749 = vld [vmem:[#allocation7 + $0x20] sm:$0xff]
        %v750 = vld [vmem:[#allocation7 + $0x28] sm:$0xff]
        %v751 = vld [vmem:[#allocation7 + $0x30] sm:$0xff]
        %v752 = vld [vmem:[#allocation7 + $0x38] sm:$0xff]
        %v753 = vld [vmem:[#allocation7 + $0x40] sm:$0xff]
        %v754 = vld [vmem:[#allocation7 + $0x48] sm:$0xff]
        %v755 = vld [vmem:[#allocation7 + $0x50] sm:$0xff]
        %v756 = vld [vmem:[#allocation7 + $0x58] sm:$0xff]
        %v757 = vld [vmem:[#allocation7 + $0x60] sm:$0xff]
        %v758 = vld [vmem:[#allocation7 + $0x68] sm:$0xff]
        %v759 = vld [vmem:[#allocation7 + $0x70] sm:$0xff]
        %v760 = vld [vmem:[#allocation7 + $0x78] sm:$0xff]
        %v761 = vld [vmem:[#allocation8] sm:$0xff]
        %v762 = vld [vmem:[#allocation8 + $0x8] sm:$0xff]
        %v763 = vld [vmem:[#allocation8 + $0x10] sm:$0xff]
        %v764 = vld [vmem:[#allocation8 + $0x18] sm:$0xff]
        %v765 = vld [vmem:[#allocation8 + $0x20] sm:$0xff]
        %v766 = vld [vmem:[#allocation8 + $0x28] sm:$0xff]
        %v767 = vld [vmem:[#allocation8 + $0x30] sm:$0xff]
        %v768 = vld [vmem:[#allocation8 + $0x38] sm:$0xff]
        %v769 = vld [vmem:[#allocation8 + $0x40] sm:$0xff]
        %v770 = vld [vmem:[#allocation8 + $0x48] sm:$0xff]
        %v771 = vld [vmem:[#allocation8 + $0x50] sm:$0xff]
        %v772 = vld [vmem:[#allocation8 + $0x58] sm:$0xff]
        %v773 = vld [vmem:[#allocation8 + $0x60] sm:$0xff]
        %v774 = vld [vmem:[#allocation8 + $0x68] sm:$0xff]
        %v775 = vld [vmem:[#allocation8 + $0x70] sm:$0xff]
        %v776 = vld [vmem:[#allocation8 + $0x78] sm:$0xff]
        %v777 = vld [vmem:[%s9] sm:$0x1]
        %v778 = vld [vmem:[%s10] sm:$0x1]
        %v779 = vld [vmem:[%s517] sm:$0xf]
        %v780 = vld [vmem:[%s517 + $0x4] sm:$0xf]
        %v781 = vld [vmem:[%s517 + $0x8] sm:$0xf]
        %v782 = vld [vmem:[%s517 + $0xc] sm:$0xf]
        %v783 = vld [vmem:[%s517 + $0x10] sm:$0xf]
        %v784 = vld [vmem:[%s517 + $0x14] sm:$0xf]
        %v785 = vld [vmem:[%s517 + $0x18] sm:$0xf]
        %v786 = vld [vmem:[%s517 + $0x1c] sm:$0xf]
        %v787 = vld [vmem:[%s517 + $0x20] sm:$0xf]
        %v788 = vld [vmem:[%s517 + $0x24] sm:$0xf]
        %v789 = vld [vmem:[%s517 + $0x28] sm:$0xf]
        %v790 = vld [vmem:[%s517 + $0x2c] sm:$0xf]
        %v791 = vld [vmem:[%s517 + $0x30] sm:$0xf]
        %v792 = vld [vmem:[%s517 + $0x34] sm:$0xf]
        %v793 = vld [vmem:[%s517 + $0x38] sm:$0xf]
        %v794 = vld [vmem:[%s517 + $0x3c] sm:$0xf]
        %v795 = vld [vmem:[%s576] sm:$0x1]
        %v796 = vunpack.c.l.bf16 %v779
        %v797 = vunpack.c.l.bf16 %v780
        %v798 = vunpack.c.l.bf16 %v781
        %v799 = vunpack.c.l.bf16 %v782
        %v800 = vunpack.c.l.bf16 %v783
        %v801 = vunpack.c.l.bf16 %v784
        %v802 = vunpack.c.l.bf16 %v785
        %v803 = vunpack.c.l.bf16 %v786
        %v804 = vunpack.c.l.bf16 %v787
        %v805 = vunpack.c.l.bf16 %v788
        %v806 = vunpack.c.l.bf16 %v789
        %v807 = vunpack.c.l.bf16 %v790
        %v808 = vunpack.c.l.bf16 %v791
        %v809 = vunpack.c.l.bf16 %v792
        %v810 = vunpack.c.l.bf16 %v793
        %v811 = vunpack.c.l.bf16 %v794
        %v812 = vmul.f32 %v761, %v796
        %v813 = vmul.f32 %v762, %v797
        %v814 = vmul.f32 %v763, %v798
        %v815 = vmul.f32 %v764, %v799
        %v816 = vmul.f32 %v765, %v800
        %v817 = vmul.f32 %v766, %v801
        %v818 = vmul.f32 %v767, %v802
        %v819 = vmul.f32 %v768, %v803
        %v820 = vmul.f32 %v769, %v804
        %v821 = vmul.f32 %v770, %v805
        %v822 = vmul.f32 %v771, %v806
        %v823 = vmul.f32 %v772, %v807
        %v824 = vmul.f32 %v773, %v808
        %v825 = vmul.f32 %v774, %v809
        %v826 = vmul.f32 %v775, %v810
        %v827 = vmul.f32 %v776, %v811
        %v828 = vadd.f32 %v745, %v812
        %v829 = vadd.f32 %v746, %v813
        %v830 = vadd.f32 %v747, %v814
        %v831 = vadd.f32 %v748, %v815
        %v832 = vadd.f32 %v749, %v816
        %v833 = vadd.f32 %v750, %v817
        %v834 = vadd.f32 %v751, %v818
        %v835 = vadd.f32 %v752, %v819
        %v836 = vadd.f32 %v753, %v820
        %v837 = vadd.f32 %v754, %v821
        %v838 = vadd.f32 %v755, %v822
        %v839 = vadd.f32 %v756, %v823
        %v840 = vadd.f32 %v757, %v824
        %v841 = vadd.f32 %v758, %v825
        %v842 = vadd.f32 %v759, %v826
        %v843 = vadd.f32 %v760, %v827
        %v844 = vunpack.c.l.bf16 %v795
        %v845 = vmul.f32 %v778, %v844
        %v846 = vadd.f32 %v777, %v845
        %v847 = vpack.c.bf16 %v744, %v743
        %v848 = vpack.c.bf16 %v829, %v828
        %v849 = vpack.c.bf16 %v831, %v830
        %v850 = vpack.c.bf16 %v833, %v832
        %v851 = vpack.c.bf16 %v835, %v834
        %v852 = vpack.c.bf16 %v837, %v836
        %v853 = vpack.c.bf16 %v839, %v838
        %v854 = vpack.c.bf16 %v841, %v840
        %v855 = vpack.c.bf16 %v843, %v842
        %v857 = vlaneseq
        %v858 = vshrl.u32 %v857, 7
        %v859 = vsub.s32 0, %v858
        %v860 = vrot.slane %v846, %v859
        %862 = vmatprep.subr.bf16.mxu0 0
        %863 = vmatpush1.bf16.msra.mxu0 %v848
        %864 = vmatprep.subr.bf16.mxu0 0
        %865 = vmatpush1.bf16.msra.mxu0 %v849
        %866 = vmatprep.subr.bf16.mxu0 0
        %867 = vmatpush1.bf16.msra.mxu0 %v850
        %868 = vmatprep.subr.bf16.mxu0 0
        %869 = vmatpush1.bf16.msra.mxu0 %v851
        %870 = vmatprep.subr.bf16.mxu0 0
        %871 = vmatpush1.bf16.msra.mxu0 %v852
        %872 = vmatprep.subr.bf16.mxu0 0
        %873 = vmatpush1.bf16.msra.mxu0 %v853
        %874 = vmatprep.subr.bf16.mxu0 0
        %875 = vmatpush1.bf16.msra.mxu0 %v854
        %876 = vmatprep.subr.bf16.mxu0 0
        %877 = vmatpush1.bf16.msra.mxu0 %v855
        %878 = vmatprep.subr.bf16.mxu0 0
        %879 = vmatpush1.bf16.msra.mxu0 0
        %880 = vmatprep.subr.bf16.mxu0 0
        %881 = vmatpush1.bf16.msra.mxu0 0
        %882 = vmatprep.subr.bf16.mxu0 0
        %883 = vmatpush1.bf16.msra.mxu0 0
        %884 = vmatprep.subr.bf16.mxu0 0
        %885 = vmatpush1.bf16.msra.mxu0 0
        %886 = vmatprep.subr.bf16.mxu0 0
        %887 = vmatpush1.bf16.msra.mxu0 0
        %888 = vmatprep.subr.bf16.mxu0 0
        %889 = vmatpush1.bf16.msra.mxu0 0
        %890 = vmatprep.subr.bf16.mxu0 0
        %891 = vmatpush1.bf16.msra.mxu0 0
        %892 = vmatprep.subr.bf16.mxu0 0
        %893 = vmatpush1.bf16.msra.mxu0 0
        %894 = vmatprep.mubr.bf16.mxu0 0
        %895 = vmatmul.mubr.bf16.gmra.mrb[0].mxu0 %v847
        %v896 = vpop.f32.mrb[0].mxu0
        %v897 = vadd.f32 %v860, %v896
        %v898 = vpop.f32.mrb[0].mxu0
        %v899 = vpop.f32.mrb[0].mxu0
        %v900 = vadd.f32 %v860, %v899
        %v901 = vpop.f32.mrb[0].mxu0
        %902 = vdwg.mxu0
        %903 = vst [vmem:[%s581] sm:$0xff] %v897
        %904 = vst [vmem:[%s581 + $0x8] sm:$0xff] %v900
        %p905 = scmp.lt.s32.totalorder %s27, 1
        %s906 = scalar_select %p905, %s27, 1
        %s907 = smul.addr %s906, 2
        %s908 = smul.addr %s907, 8
        %s909 = scalar_lea.vmem %s13, %s908
        // Predicated region
        $region97: #{bayesian_nn_forward.1} parent=71 // pred_check
          %p910 = pneg %p338
        $region98: #{bayesian_nn_forward.1} parent=71 // pred_check_branch
          %912 = sbr.rel (%p910) target = $region100
        $region99: #{bayesian_nn_forward.1} parent=71 // pred_region
          _
        $region100: #{bayesian_nn_forward.1} parent=71 // pred_fallthru
          _
      $region72: #{bayesian_nn_forward.1} parent=5 // pred_fallthru
        _
      %p913 = scmp.le.s32.totalorder 2, %s22
      // Predicated region
      $region101: #{bayesian_nn_forward.1} parent=5 // pred_check
        %p914 = pneg %p913
      $region102: #{bayesian_nn_forward.1} parent=5 // pred_check_branch
        %916 = sbr.rel (%p914) target = $region104
      $region103: #{bayesian_nn_forward.1} parent=5 // pred_region
        %s917 = ssub.s32 %s22, 2
        // Predicated region
        $region105: #{bayesian_nn_forward.1} parent=103 // pred_check
          %p918 = pneg %p344
        $region106: #{bayesian_nn_forward.1} parent=103 // pred_check_branch
          %920 = sbr.rel (%p918) target = $region108
        $region107: #{bayesian_nn_forward.1} parent=103 // pred_region
          %p921 = scmp.lt.s32.totalorder %s28, 1
          %s922 = scalar_select %p921, %s28, 1
          %s923 = smul.addr %s922, 2
          %s924 = smul.addr %s923, 8
          %s925 = scalar_lea.vmem %s13, %s924
        $region108: #{bayesian_nn_forward.1} parent=103 // pred_fallthru
          _
      $region104: #{bayesian_nn_forward.1} parent=5 // pred_fallthru
        _
    $region6: #{bayesian_nn_forward.1} parent=1 // loop_footer
      %s26 = sadd.s32 1, %s22
    $region7: #{bayesian_nn_forward.1} parent=1 // loop_footer_branch
      %21 = sbr.rel target = $region3
    $region8: #{bayesian_nn_forward.1} parent=1 // loop_exit
      _
    %926 = vsyncpa [#allocation3], 1
    %s927 = scalar_lea.sflag [#allocation3], 1
    %928 = vsyncpa %s927, 1
    %929 = vsyncpa [#allocation5], 1
    %930 = vsyncpa [#allocation9], 1

</llo_original>
